<compile_context>
chip_gen: v6e
topology: v6e:2x2x1
jax: 0.10.0
libtpu: 0.0.40
codegen_flags: <defaults>
</compile_context>

<pallas_src>
from functools import partial

import jax
import jax.numpy as jnp
from jax.experimental import pallas as pl
from jax.experimental.pallas import tpu as pltpu

IN_DIM = 20
HID_DIM = 15
OUT_DIM = 10

# 8192 rows/tile: ~4 MiB in + ~4 MiB out per buffer (last dim pads to 128
# lanes in VMEM), ~16 MiB double-buffered + intermediates => fits v7x's
# 64 MiB VMEM with headroom while amortizing per-step pipeline overhead.
DEFAULT_TILE_B = 8192
_VMEM_LIMIT_BYTES = 48 * 1024 * 1024


def mlp_kernel(x_ref, w1t_ref, b1_ref, w2t_ref, b2_ref, o_ref):
    # x_ref:   (tile_b, IN_DIM)   natural row-major activations
    # w1t_ref: (IN_DIM, HID_DIM)  = l1.weight.T
    # b1_ref:  (1, HID_DIM)
    # w2t_ref: (HID_DIM, OUT_DIM) = l2.weight.T
    # b2_ref:  (1, OUT_DIM)
    # o_ref:   (tile_b, OUT_DIM)
    x = x_ref[...]
    h = jnp.dot(x, w1t_ref[...], preferred_element_type=jnp.float32)
    h = jnp.maximum(h + b1_ref[...], 0.0)          # bias broadcast over rows, ReLU
    y = jnp.dot(h, w2t_ref[...], preferred_element_type=jnp.float32)
    o_ref[...] = (y + b2_ref[...]).astype(o_ref.dtype)


@partial(jax.jit, static_argnames=("tile_b",))
def my_model_forward(x, w1, b1, w2, b2, *, tile_b=DEFAULT_TILE_B):
    """x: (B, IN_DIM) f32 -> (B, OUT_DIM) f32.

    w1: (HID_DIM, IN_DIM), b1: (HID_DIM,), w2: (OUT_DIM, HID_DIM), b2: (OUT_DIM,)
    (native PyTorch nn.Linear parameter layout).
    """
    B = x.shape[0]

    if B <= tile_b:
        # Single block covering the full batch: block dims equal the full
        # array dims, so no padding and no wrapper-side data movement at all.
        tb = B
        n_tiles = 1
        Bp = B
    else:
        tb = tile_b                      # multiple of 8 (sublane constraint)
        n_tiles = pl.cdiv(B, tb)
        Bp = n_tiles * tb

    x_in = x if Bp == B else jnp.pad(x, ((0, Bp - B), (0, 0)))

    # Tiny one-time layout plumbing for the parameters (a few hundred bytes).
    w1t = w1.T                            # (IN_DIM, HID_DIM)
    w2t = w2.T                            # (HID_DIM, OUT_DIM)
    b1r = b1.reshape(1, HID_DIM)
    b2r = b2.reshape(1, OUT_DIM)

    flops = 2 * Bp * (IN_DIM * HID_DIM + HID_DIM * OUT_DIM)
    bytes_accessed = 4 * (
        Bp * IN_DIM + Bp * OUT_DIM
        + HID_DIM * IN_DIM + HID_DIM + OUT_DIM * HID_DIM + OUT_DIM
    )

    out = pl.pallas_call(
        mlp_kernel,
        out_shape=jax.ShapeDtypeStruct((Bp, OUT_DIM), jnp.float32),
        grid=(n_tiles,),
        in_specs=[
            # batch-tiled activation, natural layout (last dim == full dim)
            pl.BlockSpec((tb, IN_DIM), lambda i: (i, 0)),
            # grid-invariant weights/biases: fetched once, resident in VMEM
            pl.BlockSpec((IN_DIM, HID_DIM), lambda i: (0, 0)),
            pl.BlockSpec((1, HID_DIM), lambda i: (0, 0)),
            pl.BlockSpec((HID_DIM, OUT_DIM), lambda i: (0, 0)),
            pl.BlockSpec((1, OUT_DIM), lambda i: (0, 0)),
        ],
        out_specs=pl.BlockSpec((tb, OUT_DIM), lambda i: (i, 0)),
        compiler_params=pltpu.CompilerParams(
            # independent batch tiles -> shard across TCs on v7x megacore
            dimension_semantics=("parallel",),
            vmem_limit_bytes=_VMEM_LIMIT_BYTES,
        ),
        cost_estimate=pl.CostEstimate(
            flops=flops, transcendentals=0, bytes_accessed=bytes_accessed
        ),
    )(x_in, w1t, b1r, w2t, b2r)

    return out if Bp == B else out[:B]


def make_params():
    # Matches MyModel.__init__: all weights and biases set to ones,
    # stored in native PyTorch (out_features, in_features) layout.
    w1 = jnp.ones((HID_DIM, IN_DIM), dtype=jnp.float32)
    b1 = jnp.ones((HID_DIM,), dtype=jnp.float32)
    w2 = jnp.ones((OUT_DIM, HID_DIM), dtype=jnp.float32)
    b2 = jnp.ones((OUT_DIM,), dtype=jnp.float32)
    return w1, b1, w2, b2


def _ref(x, w1, b1, w2, b2):
    return jnp.maximum(x @ w1.T + b1, 0.0) @ w2.T + b2


if __name__ == "__main__":
    key = jax.random.PRNGKey(0)
    w1, b1, w2, b2 = make_params()

    # Small-batch path (single block, no padding).
    batch = 8
    x = jax.random.normal(key, (batch, IN_DIM), dtype=jnp.float32)
    out = jax.block_until_ready(my_model_forward(x, w1, b1, w2, b2))
    assert out.shape == (batch, OUT_DIM)
    assert jnp.allclose(out, _ref(x, w1, b1, w2, b2), atol=1e-5, rtol=1e-5)

    # Multi-tile path (exercises grid tiling + pad/slice) at a small size.
    batch2 = 300
    x2 = jax.random.normal(jax.random.PRNGKey(1), (batch2, IN_DIM), dtype=jnp.float32)
    out2 = jax.block_until_ready(my_model_forward(x2, w1, b1, w2, b2, tile_b=128))
    assert out2.shape == (batch2, OUT_DIM)
    assert jnp.allclose(out2, _ref(x2, w1, b1, w2, b2), atol=1e-5, rtol=1e-5)

    print("KERNEL_OK")
</pallas_src>

<mosaic_0001>
module attributes {stable_mosaic.version = 11 : i64} {
  func.func @mlp_kernel(%arg0: i32, %arg1: memref<8x20xf32, #tpu.memory_space<vmem>>, %arg2: memref<20x15xf32, #tpu.memory_space<vmem>>, %arg3: memref<1x15xf32, #tpu.memory_space<vmem>>, %arg4: memref<15x10xf32, #tpu.memory_space<vmem>>, %arg5: memref<1x10xf32, #tpu.memory_space<vmem>>, %arg6: memref<8x10xf32, #tpu.memory_space<vmem>>) attributes {dimension_semantics = [#tpu.dimension_semantics<parallel>], iteration_bounds = array<i64: 1>, scalar_prefetch = 0 : i64, scratch_operands = 0 : i64, tpu.core_type = #tpu.core_type<tc>, window_params = [{transform_indices = @transform_0, window_bounds = array<i64: 8, 20>}, {pipeline_mode = #tpu.pipeline_mode<synchronous>, transform_indices = @transform_1, window_bounds = array<i64: 20, 15>}, {pipeline_mode = #tpu.pipeline_mode<synchronous>, transform_indices = @transform_2, window_bounds = array<i64: 1, 15>}, {pipeline_mode = #tpu.pipeline_mode<synchronous>, transform_indices = @transform_3, window_bounds = array<i64: 15, 10>}, {pipeline_mode = #tpu.pipeline_mode<synchronous>, transform_indices = @transform_4, window_bounds = array<i64: 1, 10>}, {transform_indices = @transform_5, window_bounds = array<i64: 8, 10>}]} {
    %c0 = arith.constant 0 : index
    %c0_0 = arith.constant 0 : index
    %0 = vector.load %arg1[%c0, %c0_0] : memref<8x20xf32, #tpu.memory_space<vmem>>, vector<8x20xf32>
    %c0_1 = arith.constant 0 : index
    %c0_2 = arith.constant 0 : index
    %1 = vector.load %arg2[%c0_1, %c0_2] : memref<20x15xf32, #tpu.memory_space<vmem>>, vector<20x15xf32>
    %cst = arith.constant dense<0.000000e+00> : vector<8x15xf32>
    %2 = tpu.matmul %0, %1, %cst {dimension_numbers = #tpu.dot_dimension_numbers<[1], [0], [0], [1], [0, 0, 1, 1], [], []>} : vector<8x20xf32>, vector<20x15xf32>, vector<8x15xf32> -> vector<8x15xf32>
    %c0_3 = arith.constant 0 : index
    %c0_4 = arith.constant 0 : index
    %3 = vector.load %arg3[%c0_3, %c0_4] : memref<1x15xf32, #tpu.memory_space<vmem>>, vector<1x15xf32>
    %4 = vector.broadcast %3 : vector<1x15xf32> to vector<8x15xf32>
    %5 = arith.addf %2, %4 : vector<8x15xf32>
    %cst_5 = arith.constant 0.000000e+00 : f32
    %6 = vector.broadcast %cst_5 : f32 to vector<8x15xf32>
    %7 = arith.maximumf %5, %6 : vector<8x15xf32>
    %c0_6 = arith.constant 0 : index
    %c0_7 = arith.constant 0 : index
    %8 = vector.load %arg4[%c0_6, %c0_7] : memref<15x10xf32, #tpu.memory_space<vmem>>, vector<15x10xf32>
    %cst_8 = arith.constant dense<0.000000e+00> : vector<8x10xf32>
    %9 = tpu.matmul %7, %8, %cst_8 {dimension_numbers = #tpu.dot_dimension_numbers<[1], [0], [0], [1], [0, 0, 1, 1], [], []>} : vector<8x15xf32>, vector<15x10xf32>, vector<8x10xf32> -> vector<8x10xf32>
    %c0_9 = arith.constant 0 : index
    %c0_10 = arith.constant 0 : index
    %10 = vector.load %arg5[%c0_9, %c0_10] : memref<1x10xf32, #tpu.memory_space<vmem>>, vector<1x10xf32>
    %11 = vector.broadcast %10 : vector<1x10xf32> to vector<8x10xf32>
    %12 = arith.addf %9, %11 : vector<8x10xf32>
    %c0_11 = arith.constant 0 : index
    %c0_12 = arith.constant 0 : index
    %13 = vector.load %arg6[%c0_11, %c0_12] : memref<8x10xf32, #tpu.memory_space<vmem>>, vector<8x10xf32>
    tpu.vector_store %arg6[%c0_11, %c0_12], %12 {strides = array<i32>} : memref<8x10xf32, #tpu.memory_space<vmem>>, vector<8x10xf32>,
    return
  }
  func.func @transform_0(%arg0: i32) -> (i32, i32) {
    %c0_i32 = arith.constant 0 : i32
    %c0_i32_0 = arith.constant 0 : i32
    return %arg0, %c0_i32 : i32, i32
  }
  func.func @transform_1(%arg0: i32) -> (i32, i32) {
    %c0_i32 = arith.constant 0 : i32
    %c0_i32_0 = arith.constant 0 : i32
    %c0_i32_1 = arith.constant 0 : i32
    return %c0_i32, %c0_i32_0 : i32, i32
  }
  func.func @transform_2(%arg0: i32) -> (i32, i32) {
    %c0_i32 = arith.constant 0 : i32
    %c0_i32_0 = arith.constant 0 : i32
    %c0_i32_1 = arith.constant 0 : i32
    return %c0_i32, %c0_i32_0 : i32, i32
  }
  func.func @transform_3(%arg0: i32) -> (i32, i32) {
    %c0_i32 = arith.constant 0 : i32
    %c0_i32_0 = arith.constant 0 : i32
    %c0_i32_1 = arith.constant 0 : i32
    return %c0_i32, %c0_i32_0 : i32, i32
  }
  func.func @transform_4(%arg0: i32) -> (i32, i32) {
    %c0_i32 = arith.constant 0 : i32
    %c0_i32_0 = arith.constant 0 : i32
    %c0_i32_1 = arith.constant 0 : i32
    return %c0_i32, %c0_i32_0 : i32, i32
  }
  func.func @transform_5(%arg0: i32) -> (i32, i32) {
    %c0_i32 = arith.constant 0 : i32
    %c0_i32_0 = arith.constant 0 : i32
    return %arg0, %c0_i32 : i32, i32
  }
}

</mosaic_0001>

<llo_original>
// kernel: my_model_forward.1
$region0: #{my_model_forward.1}
  #allocation0 [shape = 'u32[]', space=smem, size = 0x4, offset = 0x4, fixed_abs, tag = 'smem constant byte address 0x4 - core index']
  #allocation1 [shape = 'u32[144,128]{1,0:T(1,128)}', space=vmem, size = 0x12000, scoped, tag = 'internal scratch']
  %s0 = inlined_call_operand.vmem [shape: f32[8,20], index: 0, kind: input, shape index: {}]
  %s1 = inlined_call_operand.vmem [shape: f32[20,15], index: 1, kind: input, shape index: {}]
  %s2 = inlined_call_operand.vmem [shape: f32[1,15], index: 2, kind: input, shape index: {}]
  %s3 = inlined_call_operand.vmem [shape: f32[15,10], index: 3, kind: input, shape index: {}]
  %s4 = inlined_call_operand.vmem [shape: f32[1,10], index: 4, kind: input, shape index: {}]
  %s5 = inlined_call_operand.hbm [shape: f32[8,10], index: 5, kind: output, shape index: {}]
  %s6 = sld [smem:[#allocation0]]
  $region30: #{my_model_forward.1} parent=0
    _
  %s8 = ssub.s32 1, %s6
  %s9 = scalar_select 0, %s8, %s6
  $region1: #{my_model_forward.1} parent=0
    #allocation2 [shape = 'u8[4096]{0}', space=vmem, size = 0x1000, scoped, tag = 'output window, operand 0, single buffered']
    #allocation3 [shape = 's32[1]{0}', space=sflag, size = 0x4, scoped, tag = 'scoped memory for my_model_forward.1']
    %10 = vsyncpa [#allocation3], 0
    // Predicated region
    $region2: #{my_model_forward.1} parent=1 // pred_check
      _
    $region3: #{my_model_forward.1} parent=1 // pred_check_branch
      %12 = sbr.rel (0) target = $region5
    $region4: #{my_model_forward.1} parent=1 // pred_region
      _
    $region5: #{my_model_forward.1} parent=1 // pred_fallthru
      _
    // Predicated region
    $region6: #{my_model_forward.1} parent=1 // pred_check
      _
    $region7: #{my_model_forward.1} parent=1 // pred_check_branch
      %14 = sbr.rel (0) target = $region9
    $region8: #{my_model_forward.1} parent=1 // pred_region
      _
    $region9: #{my_model_forward.1} parent=1 // pred_fallthru
      _
    // Predicated region
    $region10: #{my_model_forward.1} parent=1 // pred_check
      _
    $region11: #{my_model_forward.1} parent=1 // pred_check_branch
      %16 = sbr.rel (0) target = $region13
    $region12: #{my_model_forward.1} parent=1 // pred_region
      _
    $region13: #{my_model_forward.1} parent=1 // pred_fallthru
      _
    // Predicated region
    $region14: #{my_model_forward.1} parent=1 // pred_check
      _
    $region15: #{my_model_forward.1} parent=1 // pred_check_branch
      %18 = sbr.rel (0) target = $region17
    $region16: #{my_model_forward.1} parent=1 // pred_region
      _
    $region17: #{my_model_forward.1} parent=1 // pred_fallthru
      _
    // Predicated region
    $region18: #{my_model_forward.1} parent=1 // pred_check
      _
    $region19: #{my_model_forward.1} parent=1 // pred_check_branch
      %20 = sbr.rel (0) target = $region21
    $region20: #{my_model_forward.1} parent=1 // pred_region
      _
    $region21: #{my_model_forward.1} parent=1 // pred_fallthru
      _
    %v21 = vld [vmem:[%s0] sm:$0xff]
    %v22 = vld [vmem:[%s1] sm:$0xff]
    %v23 = vld [vmem:[%s1 + $0x8] sm:$0xff]
    %v24 = vld [vmem:[%s1 + $0x10] sm:$0xf]
    %v25 = vld [vmem:[%s2] sm:$0x1]
    %v27 = vlaneseq
    %v28 = vshrl.u32 %v27, 7
    %v29 = vsub.s32 0, %v28
    %v30 = vrot.slane %v25, %v29
    %vm32 = vcmask 162816
    %v34 = vsel %vm32, %v21, 0
    %vm36 = vcmask 1043456
    %v38 = vsel %vm36, %v24, 0
    %40 = vmatprep.subr.mxu0 0.0
    %41 = vmatpush1.msra.mxu0 0.0
    %42 = vmatprep.subr.mxu0 0.0
    %43 = vmatpush1.msra.mxu0 0.0
    %44 = vmatprep.subr.mxu0 0.0
    %45 = vmatpush1.msra.mxu0 0.0
    %46 = vmatprep.subr.mxu0 0.0
    %47 = vmatpush1.msra.mxu0 0.0
    %48 = vmatprep.subr.mxu0 0.0
    %49 = vmatpush1.msra.mxu0 0.0
    %50 = vmatprep.subr.mxu0 0.0
    %51 = vmatpush1.msra.mxu0 0.0
    %52 = vmatprep.subr.mxu0 0.0
    %53 = vmatpush1.msra.mxu0 0.0
    %54 = vmatprep.subr.mxu0 0.0
    %55 = vmatpush1.msra.mxu0 0.0
    %56 = vmatprep.subr.mxu0 0.0
    %57 = vmatpush1.msra.mxu0 0.0
    %58 = vmatprep.subr.mxu0 0.0
    %59 = vmatpush1.msra.mxu0 0.0
    %60 = vmatprep.subr.mxu0 0.0
    %61 = vmatpush1.msra.mxu0 0.0
    %62 = vmatprep.subr.mxu0 0.0
    %63 = vmatpush1.msra.mxu0 0.0
    %64 = vmatprep.subr.mxu0 0.0
    %65 = vmatpush1.msra.mxu0 0.0
    %66 = vmatprep.subr.mxu0 0.0
    %67 = vmatpush1.msra.mxu0 %v38
    %68 = vmatprep.subr.mxu0 0.0
    %69 = vmatpush1.msra.mxu0 %v23
    %70 = vmatprep.subr.mxu0 0.0
    %71 = vmatpush1.msra.mxu0 %v22
    %72 = vmatprep.subr.mxu0 0.0
    %73 = vmatpush2.msra.mxu0 0.0
    %74 = vmatprep.subr.mxu0 0.0
    %75 = vmatpush2.msra.mxu0 0.0
    %76 = vmatprep.subr.mxu0 0.0
    %77 = vmatpush2.msra.mxu0 0.0
    %78 = vmatprep.subr.mxu0 0.0
    %79 = vmatpush2.msra.mxu0 0.0
    %80 = vmatprep.subr.mxu0 0.0
    %81 = vmatpush2.msra.mxu0 0.0
    %82 = vmatprep.subr.mxu0 0.0
    %83 = vmatpush2.msra.mxu0 0.0
    %84 = vmatprep.subr.mxu0 0.0
    %85 = vmatpush2.msra.mxu0 0.0
    %86 = vmatprep.subr.mxu0 0.0
    %87 = vmatpush2.msra.mxu0 0.0
    %88 = vmatprep.subr.mxu0 0.0
    %89 = vmatpush2.msra.mxu0 0.0
    %90 = vmatprep.subr.mxu0 0.0
    %91 = vmatpush2.msra.mxu0 0.0
    %92 = vmatprep.subr.mxu0 0.0
    %93 = vmatpush2.msra.mxu0 0.0
    %94 = vmatprep.subr.mxu0 0.0
    %95 = vmatpush2.msra.mxu0 0.0
    %96 = vmatprep.subr.mxu0 0.0
    %97 = vmatpush2.msra.mxu0 0.0
    %98 = vmatprep.subr.mxu0 0.0
    %99 = vmatpush2.msra.mxu0 0.0
    %100 = vmatprep.subr.mxu0 0.0
    %101 = vmatpush2.msra.mxu0 0.0
    %102 = vmatprep.subr.mxu0 0.0
    %103 = vmatpush2.msra.mxu0 0.0
    %104 = vmatprep.mubr.f32.mxu0 0.0
    %105 = vmatmul.mubr.f32.gmra.mxu0 %v34
    %v106 = vpop.f32.mrf.mxu0
    %v107 = vadd.f32 %v30, %v106
    %v108 = vpop.f32.mrf.mxu0
    %109 = vdwg.mxu0
    %v110 = vmax.f32 %v107, 0.0
    %v111 = vld [vmem:[%s3] sm:$0xff]
    %v112 = vld [vmem:[%s3 + $0x8] sm:$0x7f]
    %v113 = vld [vmem:[%s4] sm:$0x1]
    %v115 = vlaneseq
    %v116 = vshrl.u32 %v115, 7
    %v117 = vsub.s32 0, %v116
    %v118 = vrot.slane %v113, %v117
    %vm120 = vcmask 121856
    %v122 = vsel %vm120, %v110, 0
    %vm124 = vcmask 1046528
    %v126 = vsel %vm124, %v112, 0
    %128 = vmatprep.subr.mxu0 0.0
    %129 = vmatpush1.msra.mxu0 0.0
    %130 = vmatprep.subr.mxu0 0.0
    %131 = vmatpush1.msra.mxu0 0.0
    %132 = vmatprep.subr.mxu0 0.0
    %133 = vmatpush1.msra.mxu0 0.0
    %134 = vmatprep.subr.mxu0 0.0
    %135 = vmatpush1.msra.mxu0 0.0
    %136 = vmatprep.subr.mxu0 0.0
    %137 = vmatpush1.msra.mxu0 0.0
    %138 = vmatprep.subr.mxu0 0.0
    %139 = vmatpush1.msra.mxu0 0.0
    %140 = vmatprep.subr.mxu0 0.0
    %141 = vmatpush1.msra.mxu0 0.0
    %142 = vmatprep.subr.mxu0 0.0
    %143 = vmatpush1.msra.mxu0 0.0
    %144 = vmatprep.subr.mxu0 0.0
    %145 = vmatpush1.msra.mxu0 0.0
    %146 = vmatprep.subr.mxu0 0.0
    %147 = vmatpush1.msra.mxu0 0.0
    %148 = vmatprep.subr.mxu0 0.0
    %149 = vmatpush1.msra.mxu0 0.0
    %150 = vmatprep.subr.mxu0 0.0
    %151 = vmatpush1.msra.mxu0 0.0
    %152 = vmatprep.subr.mxu0 0.0
    %153 = vmatpush1.msra.mxu0 0.0
    %154 = vmatprep.subr.mxu0 0.0
    %155 = vmatpush1.msra.mxu0 0.0
    %156 = vmatprep.subr.mxu0 0.0
    %157 = vmatpush1.msra.mxu0 %v126
    %158 = vmatprep.subr.mxu0 0.0
    %159 = vmatpush1.msra.mxu0 %v111
    %160 = vmatprep.subr.mxu0 0.0
    %161 = vmatpush2.msra.mxu0 0.0
    %162 = vmatprep.subr.mxu0 0.0
    %163 = vmatpush2.msra.mxu0 0.0
    %164 = vmatprep.subr.mxu0 0.0
    %165 = vmatpush2.msra.mxu0 0.0
    %166 = vmatprep.subr.mxu0 0.0
    %167 = vmatpush2.msra.mxu0 0.0
    %168 = vmatprep.subr.mxu0 0.0
    %169 = vmatpush2.msra.mxu0 0.0
    %170 = vmatprep.subr.mxu0 0.0
    %171 = vmatpush2.msra.mxu0 0.0
    %172 = vmatprep.subr.mxu0 0.0
    %173 = vmatpush2.msra.mxu0 0.0
    %174 = vmatprep.subr.mxu0 0.0
    %175 = vmatpush2.msra.mxu0 0.0
    %176 = vmatprep.subr.mxu0 0.0
    %177 = vmatpush2.msra.mxu0 0.0
    %178 = vmatprep.subr.mxu0 0.0
    %179 = vmatpush2.msra.mxu0 0.0
    %180 = vmatprep.subr.mxu0 0.0
    %181 = vmatpush2.msra.mxu0 0.0
    %182 = vmatprep.subr.mxu0 0.0
    %183 = vmatpush2.msra.mxu0 0.0
    %184 = vmatprep.subr.mxu0 0.0
    %185 = vmatpush2.msra.mxu0 0.0
    %186 = vmatprep.subr.mxu0 0.0
    %187 = vmatpush2.msra.mxu0 0.0
    %188 = vmatprep.subr.mxu0 0.0
    %189 = vmatpush2.msra.mxu0 0.0
    %190 = vmatprep.subr.mxu0 0.0
    %191 = vmatpush2.msra.mxu0 0.0
    %192 = vmatprep.mubr.f32.mxu0 0.0
    %193 = vmatmul.mubr.f32.gmra.mxu0 %v122
    %v194 = vpop.f32.mrf.mxu0
    %v195 = vadd.f32 %v118, %v194
    %v196 = vpop.f32.mrf.mxu0
    %197 = vdwg.mxu0
    %vm198 = vcmask 80896
    %199 = vst.msk [vmem:[#allocation2] sm:$0xff] %vm198, %v195
    // Predicated region
    $region22: #{my_model_forward.1} parent=1 // pred_check
      _
    $region23: #{my_model_forward.1} parent=1 // pred_check_branch
      %201 = sbr.rel (0) target = $region25
    $region24: #{my_model_forward.1} parent=1 // pred_region
      %s203 = ssub.s32 128, 128
      %204 = vsyncadd [#allocation3], %s203
      %s206 = sshll.u32 [#allocation2], 4
      %s207 = int_to_ptr.vmem [resolvable:$true] %s206
      %209 = dma.vmem_to_hbm [thread:$0]  %s207, 128, %s5, [#allocation3]
    $region25: #{my_model_forward.1} parent=1 // pred_fallthru
      _
    // Predicated region
    $region26: #{my_model_forward.1} parent=1 // pred_check
      _
    $region27: #{my_model_forward.1} parent=1 // pred_check_branch
      %211 = sbr.rel (0) target = $region29
    $region28: #{my_model_forward.1} parent=1 // pred_region
      %212 = dma.done [#allocation3], 128
    $region29: #{my_model_forward.1} parent=1 // pred_fallthru
      _
    %213 = vsyncpa [#allocation3], 1

</llo_original>
